<compile_context>
chip_gen: v7x
topology: tpu7x:2x2x1
jax: 0.10.0
libtpu: 0.0.40
codegen_flags: <defaults>
</compile_context>

<pallas_src>
import math
import jax
import jax.numpy as jnp
from jax.experimental import pallas as pl
from jax.experimental.pallas import tpu as pltpu


# ----------------------------------------------------------------------------
# Plain-JAX glue: index computation (FPS + ball query), matching pointnet2.
# ----------------------------------------------------------------------------
def furthest_point_sample(xyz, npoint):
    """xyz: (B, N, 3) -> (B, npoint) int32.  Starts from index 0 (pointnet2)."""
    B, N, _ = xyz.shape

    def body(i, state):
        idx, dists, farthest = state
        idx = idx.at[:, i].set(farthest)
        centroid = xyz[jnp.arange(B), farthest]                  # (B, 3)
        d = jnp.sum((xyz - centroid[:, None, :]) ** 2, axis=-1)  # (B, N)
        dists = jnp.minimum(dists, d)
        farthest = jnp.argmax(dists, axis=-1).astype(jnp.int32)
        return idx, dists, farthest

    idx0 = jnp.zeros((B, npoint), jnp.int32)
    dists0 = jnp.full((B, N), 1e10, jnp.float32)
    farthest0 = jnp.zeros((B,), jnp.int32)
    idx, _, _ = jax.lax.fori_loop(0, npoint, body, (idx0, dists0, farthest0))
    return idx


def ball_query(radius, nsample, xyz, new_xyz):
    """xyz: (B, N, 3), new_xyz: (B, P, 3) -> (B, P, nsample) int32.

    Semantics match pointnet2's CUDA ball_query: the first `nsample` point
    indices (in index order) with squared distance < radius^2; if fewer are
    found, remaining slots are filled with the first found index.
    """
    N = xyz.shape[1]
    d2 = jnp.sum((new_xyz[:, :, None, :] - xyz[:, None, :, :]) ** 2, axis=-1)
    within = d2 < (radius * radius)                               # (B, P, N)
    key = jnp.where(within, jnp.arange(N)[None, None, :], N)
    sorted_keys = jnp.sort(key, axis=-1)[:, :, :nsample]          # first k indices
    first = sorted_keys[:, :, :1]                                 # always valid (query pt in xyz)
    idx = jnp.where(sorted_keys == N, first, sorted_keys)
    return idx.astype(jnp.int32)


# ----------------------------------------------------------------------------
# Pallas kernel: K-chunked one-hot gather matmuls + running max over neighbors.
# ----------------------------------------------------------------------------
def paipool_kernel(idx_ref, slab_ref, xout_ref, fout_ref):
    # idx_ref : (1, NG, CHUNK) int32 -- neighbor ids of this P tile, group-major;
    #                                   column j*TP+p = neighbor g*G+j of point p.
    # slab_ref: (1, CD, N)     bf16  -- [W @ feat ; pad ; xyz] of this batch elem.
    # xout_ref: (1, D, TP)     f32
    # fout_ref: (1, C, TP)     f32
    C = fout_ref.shape[1]
    D = xout_ref.shape[1]
    CD = slab_ref.shape[1]
    N = slab_ref.shape[2]
    TP = xout_ref.shape[2]
    NG = idx_ref.shape[1]
    CHUNK = idx_ref.shape[2]
    G = CHUNK // TP
    C_pad = CD - D

    # Hoisted once (JAX does not CSE broadcast_in_dim); reused by every group.
    n_iota = jax.lax.broadcasted_iota(jnp.int32, (N, CHUNK), 0)    # (N, CHUNK)
    slab = slab_ref[0]                                             # (CD, N) bf16

    # K-chunked gather: one (N, CHUNK) one-hot + one MXU matmul per group, with
    # a running elementwise max -> live intermediates are O(N*CHUNK), not
    # O(N*K*TP).  The one-hot is exact 0/1, so the bf16 gather is bit-exact
    # w.r.t. the bf16 slab values.
    # TODO(synk): for very large N (>~4-8K points) a scalar-prefetched DMA row
    # gather of the (N, CD) slab would beat the O(N*K*P*CD) one-hot matmul.
    m = jnp.full((CD, TP), -jnp.inf, dtype=jnp.float32)
    for g in range(NG):                         # NG small & static -> unrolled
        idx_chunk = idx_ref[0, g:g + 1, :]                         # (1, CHUNK)
        onehot = (n_iota == idx_chunk).astype(jnp.bfloat16)        # (N, CHUNK)
        gathered = jnp.dot(slab, onehot,
                           preferred_element_type=jnp.float32)     # (CD, CHUNK)
        for j in range(G):                      # max over the G lane sub-chunks
            m = jnp.maximum(m, gathered[:, j * TP:(j + 1) * TP])

    # Lane-dense, sublane-aligned output stores (C_pad is a multiple of 8).
    fout_ref[0] = m[:C, :].astype(fout_ref.dtype)
    xout_ref[0] = m[C_pad:C_pad + D, :].astype(xout_ref.dtype)


def paipool_forward(x, feature, w, *, num_pool, k, nlayer, mxu_lane_chunk=256):
    """PaiPool forward.

    x       : (B, 3, N) float32  (coordinates, PyTorch layout)
    feature : (B, C, N) float32
    w       : (C, C)    float32  (Conv2d 1x1 weight, out x in, no bias)
    mxu_lane_chunk : per-matmul output lane width target (256 for v6e/v7x,
                     use 128 on v5e).
    returns : x_out (B, 3, num_pool), feat_out (B, C, num_pool)
    """
    B, D, N = x.shape
    C = feature.shape[1]
    P = num_pool

    # --- index selection (FPS + ball query) --------------------------------
    # TODO(synk): FPS + ball-query index selection are sequential / sort-based
    # integer index ops; kept in plain JAX glue rather than in the kernel.
    xyz = jnp.transpose(x, (0, 2, 1))                      # (B, N, 3)
    fps_idx = furthest_point_sample(xyz, P)                # (B, P)
    new_xyz = jax.vmap(lambda pts, ii: pts[ii])(xyz, fps_idx)
    sub_index = ball_query(0.2 * nlayer, k, xyz, new_xyz)  # (B, P, k) int32

    # --- tiling choices -----------------------------------------------------
    # Pad P to a multiple of 128 so output stores are lane-dense/unmasked.
    P_pad = -(-P // 128) * 128
    TP = 256 if P_pad % 256 == 0 else 128      # wider tiles where P allows
    num_pt = P_pad // TP
    # Group G neighbors per gather matmul so the chunk matches the MXU width
    # (256 lanes on v6e/v7x, 128 on v5e).  G must divide k.
    G = 1
    for cand in (4, 2):
        if k % cand == 0 and cand * TP <= mxu_lane_chunk:
            G = cand
            break
    NG = k // G
    CHUNK = G * TP

    # --- neighbor-index tiling (group-major, P-minor) -----------------------
    idx_pad = jnp.pad(sub_index, ((0, 0), (0, P_pad - P), (0, 0)))   # zeros -> gather pt 0
    idx_tiled = jnp.transpose(
        idx_pad.reshape(B, num_pt, TP, NG, G), (0, 1, 3, 4, 2)
    ).reshape(B * num_pt, NG, CHUNK)

    # --- slab precompute: bf16 [W @ feat ; pad ; xyz] -----------------------
    # 1x1 conv commutes with the per-point gather, so it is applied ONCE per
    # batch element here (bf16 operands, f32 MXU accumulation).
    C_pad = -(-C // 8) * 8                      # xyz rows land sublane-aligned
    tfeat = jnp.einsum('oc,bcn->bon',
                       w.astype(jnp.bfloat16), feature.astype(jnp.bfloat16),
                       preferred_element_type=jnp.float32)           # (B, C, N)
    parts = [tfeat.astype(jnp.bfloat16)]
    if C_pad > C:
        parts.append(jnp.zeros((B, C_pad - C, N), jnp.bfloat16))
    # TODO(synk): coordinates are carried in bf16 inside the slab; if f32-exact
    # pooled xyz is needed downstream, gather the 3 xyz rows via a separate
    # f32 path (negligible cost).
    parts.append(x.astype(jnp.bfloat16))
    slab = jnp.concatenate(parts, axis=1)                            # (B, CD, N)
    CD = C_pad + D

    # --- VMEM budget: double-buffered blocks + intermediates, 2x headroom ---
    blk_bytes = (2 * CD * N * 2            # slab block (bf16)
                 + 2 * NG * CHUNK * 4      # idx block (int32)
                 + 2 * (C + D) * TP * 4)   # output blocks (f32)
    interm_bytes = (N * CHUNK * (4 + 2)    # iota (i32) + one-hot (bf16)
                    + CD * CHUNK * 4       # gathered (f32)
                    + CD * TP * 4          # running max (f32)
                    + CD * N * 2)          # slab value
    vmem_limit = int(min(64 << 20,
                         max(16 << 20, 2 * (blk_bytes + interm_bytes) + (4 << 20))))

    x_out, f_out = pl.pallas_call(
        paipool_kernel,
        out_shape=(
            jax.ShapeDtypeStruct((B, D, P_pad), x.dtype),
            jax.ShapeDtypeStruct((B, C, P_pad), feature.dtype),
        ),
        grid=(B, num_pt),
        in_specs=[
            # per-tile neighbor indices
            pl.BlockSpec((1, NG, CHUNK), lambda b, pt: (b * num_pt + pt, 0, 0)),
            # slab block is constant across P tiles -> no re-DMA within a batch
            pl.BlockSpec((1, CD, N), lambda b, pt: (b, 0, 0)),
        ],
        out_specs=(
            pl.BlockSpec((1, D, TP), lambda b, pt: (b, 0, pt)),
            pl.BlockSpec((1, C, TP), lambda b, pt: (b, 0, pt)),
        ),
        compiler_params=pltpu.CompilerParams(
            # No cross-tile state anymore (slab is an input), so both grid axes
            # are fully parallel -> megacore shards B*num_pt across TCs (v7x).
            dimension_semantics=("parallel", "parallel"),
            vmem_limit_bytes=vmem_limit,
        ),
    )(idx_tiled, slab)

    # Outputs are already in PyTorch layout; just drop the P padding.
    return x_out[:, :, :P], f_out[:, :, :P]


# ----------------------------------------------------------------------------
# Pure-JAX reference (direct gather + f32 conv + max), for a correctness check.
# ----------------------------------------------------------------------------
def paipool_reference(x, feature, w, *, num_pool, k, nlayer):
    xyz = jnp.transpose(x, (0, 2, 1))
    fps_idx = furthest_point_sample(xyz, num_pool)
    new_xyz = jax.vmap(lambda pts, ii: pts[ii])(xyz, fps_idx)
    idx = ball_query(0.2 * nlayer, k, xyz, new_xyz)                 # (B, P, k)

    gx = jax.vmap(lambda a, ii: a[:, ii])(x, idx)                   # (B, 3, P, k)
    x_out = jnp.max(gx, axis=-1)                                    # (B, 3, P)

    gf = jax.vmap(lambda a, ii: a[:, ii])(feature, idx)             # (B, C, P, k)
    tf = jnp.einsum("oc,bcpk->bopk", w, gf,
                    precision=jax.lax.Precision.HIGHEST)
    f_out = jnp.max(tf, axis=-1)                                    # (B, C, P)
    return x_out, f_out


if __name__ == "__main__":
    B, N, D = 2, 64, 3
    in_c = 32
    k = 8
    nlayer = 1
    num_pool = 8

    key = jax.random.PRNGKey(0)
    kx, kf, kw = jax.random.split(key, 3)
    x = jax.random.uniform(kx, (B, D, N), dtype=jnp.float32)            # coords in [0,1)
    feature = jax.random.normal(kf, (B, in_c, N), dtype=jnp.float32)
    bound = 1.0 / math.sqrt(in_c)                                       # Conv2d default-ish init
    w = jax.random.uniform(kw, (in_c, in_c), minval=-bound, maxval=bound,
                           dtype=jnp.float32)

    x_out, f_out = paipool_forward(x, feature, w,
                                   num_pool=num_pool, k=k, nlayer=nlayer)
    jax.block_until_ready((x_out, f_out))

    x_ref, f_ref = paipool_reference(x, feature, w,
                                     num_pool=num_pool, k=k, nlayer=nlayer)
    assert x_out.shape == (B, D, num_pool) and f_out.shape == (B, in_c, num_pool)
    # xyz: bf16 rounding of coords in [0,1) -> error <= ~2e-3.
    assert float(jnp.max(jnp.abs(x_out - x_ref))) < 5e-3
    # features: bf16 conv operands + bf16 slab rounding vs f32-HIGHEST ref;
    # typical ~5e-3, bound well below 3e-2 for C=32.
    assert float(jnp.max(jnp.abs(f_out - f_ref))) < 3e-2

    print("KERNEL_OK")
</pallas_src>

<mosaic_0001>
module attributes {stable_mosaic.version = 11 : i64} {
  func.func @paipool_kernel(%arg0: i32, %arg1: i32, %arg2: memref<1x4x256xi32, #tpu.memory_space<vmem>>, %arg3: memref<1x35x64xbf16, #tpu.memory_space<vmem>>, %arg4: memref<1x3x128xf32, #tpu.memory_space<vmem>>, %arg5: memref<1x32x128xf32, #tpu.memory_space<vmem>>) attributes {dimension_semantics = [#tpu.dimension_semantics<parallel>, #tpu.dimension_semantics<parallel>], iteration_bounds = array<i64: 2, 1>, scalar_prefetch = 0 : i64, scratch_operands = 0 : i64, tpu.core_type = #tpu.core_type<tc>, window_params = [{transform_indices = @transform_0, window_bounds = array<i64: 1, 4, 256>}, {transform_indices = @transform_1, window_bounds = array<i64: 1, 35, 64>}, {transform_indices = @transform_2, window_bounds = array<i64: 1, 3, 128>}, {transform_indices = @transform_3, window_bounds = array<i64: 1, 32, 128>}]} {
    %0 = tpu.iota {dimensions = array<i32: 0>} : vector<64x256xi32>
    %c0 = arith.constant 0 : index
    %c0_0 = arith.constant 0 : index
    %c0_1 = arith.constant 0 : index
    %1 = vector.load %arg3[%c0, %c0_0, %c0_1] : memref<1x35x64xbf16, #tpu.memory_space<vmem>>, vector<1x35x64xbf16>
    %2 = vector.shape_cast %1 : vector<1x35x64xbf16> to vector<35x64xbf16>
    %cst = arith.constant 0xFF800000 : f32
    %3 = vector.broadcast %cst : f32 to vector<35x128xf32>
    %c0_2 = arith.constant 0 : index
    %c0_3 = arith.constant 0 : index
    %c0_4 = arith.constant 0 : index
    %4 = vector.load %arg2[%c0_2, %c0_3, %c0_4] : memref<1x4x256xi32, #tpu.memory_space<vmem>>, vector<1x1x256xi32>
    %5 = vector.shape_cast %4 : vector<1x1x256xi32> to vector<1x256xi32>
    %6 = vector.broadcast %5 : vector<1x256xi32> to vector<64x256xi32>
    %7 = arith.cmpi eq, %0, %6 : vector<64x256xi32>
    %8 = arith.extui %7 : vector<64x256xi1> to vector<64x256xi32>
    %9 = arith.sitofp %8 : vector<64x256xi32> to vector<64x256xf32>
    %10 = arith.truncf %9 : vector<64x256xf32> to vector<64x256xbf16>
    %cst_5 = arith.constant dense<0.000000e+00> : vector<35x256xf32>
    %11 = tpu.matmul %2, %10, %cst_5 {dimension_numbers = #tpu.dot_dimension_numbers<[1], [0], [0], [1], [0, 0, 1, 1], [], []>} : vector<35x64xbf16>, vector<64x256xbf16>, vector<35x256xf32> -> vector<35x256xf32>
    %12 = vector.extract_strided_slice %11 {offsets = [0, 0], sizes = [35, 128], strides = [1, 1]} : vector<35x256xf32> to vector<35x128xf32>
    %13 = arith.maximumf %3, %12 : vector<35x128xf32>
    %14 = vector.extract_strided_slice %11 {offsets = [0, 128], sizes = [35, 128], strides = [1, 1]} : vector<35x256xf32> to vector<35x128xf32>
    %15 = arith.maximumf %13, %14 : vector<35x128xf32>
    %c0_6 = arith.constant 0 : index
    %c1 = arith.constant 1 : index
    %c0_7 = arith.constant 0 : index
    %16 = vector.load %arg2[%c0_6, %c1, %c0_7] : memref<1x4x256xi32, #tpu.memory_space<vmem>>, vector<1x1x256xi32>
    %17 = vector.shape_cast %16 : vector<1x1x256xi32> to vector<1x256xi32>
    %18 = vector.broadcast %17 : vector<1x256xi32> to vector<64x256xi32>
    %19 = arith.cmpi eq, %0, %18 : vector<64x256xi32>
    %20 = arith.extui %19 : vector<64x256xi1> to vector<64x256xi32>
    %21 = arith.sitofp %20 : vector<64x256xi32> to vector<64x256xf32>
    %22 = arith.truncf %21 : vector<64x256xf32> to vector<64x256xbf16>
    %cst_8 = arith.constant dense<0.000000e+00> : vector<35x256xf32>
    %23 = tpu.matmul %2, %22, %cst_8 {dimension_numbers = #tpu.dot_dimension_numbers<[1], [0], [0], [1], [0, 0, 1, 1], [], []>} : vector<35x64xbf16>, vector<64x256xbf16>, vector<35x256xf32> -> vector<35x256xf32>
    %24 = vector.extract_strided_slice %23 {offsets = [0, 0], sizes = [35, 128], strides = [1, 1]} : vector<35x256xf32> to vector<35x128xf32>
    %25 = arith.maximumf %15, %24 : vector<35x128xf32>
    %26 = vector.extract_strided_slice %23 {offsets = [0, 128], sizes = [35, 128], strides = [1, 1]} : vector<35x256xf32> to vector<35x128xf32>
    %27 = arith.maximumf %25, %26 : vector<35x128xf32>
    %c0_9 = arith.constant 0 : index
    %c2 = arith.constant 2 : index
    %c0_10 = arith.constant 0 : index
    %28 = vector.load %arg2[%c0_9, %c2, %c0_10] : memref<1x4x256xi32, #tpu.memory_space<vmem>>, vector<1x1x256xi32>
    %29 = vector.shape_cast %28 : vector<1x1x256xi32> to vector<1x256xi32>
    %30 = vector.broadcast %29 : vector<1x256xi32> to vector<64x256xi32>
    %31 = arith.cmpi eq, %0, %30 : vector<64x256xi32>
    %32 = arith.extui %31 : vector<64x256xi1> to vector<64x256xi32>
    %33 = arith.sitofp %32 : vector<64x256xi32> to vector<64x256xf32>
    %34 = arith.truncf %33 : vector<64x256xf32> to vector<64x256xbf16>
    %cst_11 = arith.constant dense<0.000000e+00> : vector<35x256xf32>
    %35 = tpu.matmul %2, %34, %cst_11 {dimension_numbers = #tpu.dot_dimension_numbers<[1], [0], [0], [1], [0, 0, 1, 1], [], []>} : vector<35x64xbf16>, vector<64x256xbf16>, vector<35x256xf32> -> vector<35x256xf32>
    %36 = vector.extract_strided_slice %35 {offsets = [0, 0], sizes = [35, 128], strides = [1, 1]} : vector<35x256xf32> to vector<35x128xf32>
    %37 = arith.maximumf %27, %36 : vector<35x128xf32>
    %38 = vector.extract_strided_slice %35 {offsets = [0, 128], sizes = [35, 128], strides = [1, 1]} : vector<35x256xf32> to vector<35x128xf32>
    %39 = arith.maximumf %37, %38 : vector<35x128xf32>
    %c0_12 = arith.constant 0 : index
    %c3 = arith.constant 3 : index
    %c0_13 = arith.constant 0 : index
    %40 = vector.load %arg2[%c0_12, %c3, %c0_13] : memref<1x4x256xi32, #tpu.memory_space<vmem>>, vector<1x1x256xi32>
    %41 = vector.shape_cast %40 : vector<1x1x256xi32> to vector<1x256xi32>
    %42 = vector.broadcast %41 : vector<1x256xi32> to vector<64x256xi32>
    %43 = arith.cmpi eq, %0, %42 : vector<64x256xi32>
    %44 = arith.extui %43 : vector<64x256xi1> to vector<64x256xi32>
    %45 = arith.sitofp %44 : vector<64x256xi32> to vector<64x256xf32>
    %46 = arith.truncf %45 : vector<64x256xf32> to vector<64x256xbf16>
    %cst_14 = arith.constant dense<0.000000e+00> : vector<35x256xf32>
    %47 = tpu.matmul %2, %46, %cst_14 {dimension_numbers = #tpu.dot_dimension_numbers<[1], [0], [0], [1], [0, 0, 1, 1], [], []>} : vector<35x64xbf16>, vector<64x256xbf16>, vector<35x256xf32> -> vector<35x256xf32>
    %48 = vector.extract_strided_slice %47 {offsets = [0, 0], sizes = [35, 128], strides = [1, 1]} : vector<35x256xf32> to vector<35x128xf32>
    %49 = arith.maximumf %39, %48 : vector<35x128xf32>
    %50 = vector.extract_strided_slice %47 {offsets = [0, 128], sizes = [35, 128], strides = [1, 1]} : vector<35x256xf32> to vector<35x128xf32>
    %51 = arith.maximumf %49, %50 : vector<35x128xf32>
    %52 = vector.extract_strided_slice %51 {offsets = [0, 0], sizes = [32, 128], strides = [1, 1]} : vector<35x128xf32> to vector<32x128xf32>
    %c0_15 = arith.constant 0 : index
    %c0_16 = arith.constant 0 : index
    %c0_17 = arith.constant 0 : index
    %53 = vector.load %arg5[%c0_15, %c0_16, %c0_17] : memref<1x32x128xf32, #tpu.memory_space<vmem>>, vector<1x32x128xf32>
    %54 = vector.shape_cast %53 : vector<1x32x128xf32> to vector<32x128xf32>
    %55 = vector.shape_cast %52 : vector<32x128xf32> to vector<1x32x128xf32>
    tpu.vector_store %arg5[%c0_15, %c0_16, %c0_17], %55 {strides = array<i32>} : memref<1x32x128xf32, #tpu.memory_space<vmem>>, vector<1x32x128xf32>,
    %56 = vector.extract_strided_slice %51 {offsets = [32, 0], sizes = [3, 128], strides = [1, 1]} : vector<35x128xf32> to vector<3x128xf32>
    %c0_18 = arith.constant 0 : index
    %c0_19 = arith.constant 0 : index
    %c0_20 = arith.constant 0 : index
    %57 = vector.load %arg4[%c0_18, %c0_19, %c0_20] : memref<1x3x128xf32, #tpu.memory_space<vmem>>, vector<1x3x128xf32>
    %58 = vector.shape_cast %57 : vector<1x3x128xf32> to vector<3x128xf32>
    %59 = vector.shape_cast %56 : vector<3x128xf32> to vector<1x3x128xf32>
    tpu.vector_store %arg4[%c0_18, %c0_19, %c0_20], %59 {strides = array<i32>} : memref<1x3x128xf32, #tpu.memory_space<vmem>>, vector<1x3x128xf32>,
    return
  }
  func.func @transform_0(%arg0: i32, %arg1: i32) -> (i32, i32, i32) {
    %c1_i32 = arith.constant 1 : i32
    %0 = arith.muli %arg0, %c1_i32 : i32
    %1 = arith.addi %0, %arg1 : i32
    %c0_i32 = arith.constant 0 : i32
    %c0_i32_0 = arith.constant 0 : i32
    %c0_i32_1 = arith.constant 0 : i32
    return %1, %c0_i32, %c0_i32_0 : i32, i32, i32
  }
  func.func @transform_1(%arg0: i32, %arg1: i32) -> (i32, i32, i32) {
    %c0_i32 = arith.constant 0 : i32
    %c0_i32_0 = arith.constant 0 : i32
    %c0_i32_1 = arith.constant 0 : i32
    return %arg0, %c0_i32, %c0_i32_0 : i32, i32, i32
  }
  func.func @transform_2(%arg0: i32, %arg1: i32) -> (i32, i32, i32) {
    %c0_i32 = arith.constant 0 : i32
    %c0_i32_0 = arith.constant 0 : i32
    return %arg0, %c0_i32, %arg1 : i32, i32, i32
  }
  func.func @transform_3(%arg0: i32, %arg1: i32) -> (i32, i32, i32) {
    %c0_i32 = arith.constant 0 : i32
    %c0_i32_0 = arith.constant 0 : i32
    return %arg0, %c0_i32, %arg1 : i32, i32, i32
  }
}

</mosaic_0001>

<llo_original>
// kernel: tpu_custom_call.1
$region0: #{tpu_custom_call.1}
  #allocation0 [shape = 'u32[]', space=smem, size = 0x4, offset = 0x4, fixed_abs, tag = 'smem constant byte address 0x4 - core index']
  #allocation1 [shape = 'u32[144,128]{1,0:T(1,128)}', space=vmem, size = 0x12000, scoped, tag = 'internal scratch']
  %s0 = inlined_call_operand.vmem [shape: s32[2,4,256], index: 0, kind: input, shape index: {}]
  %s1 = inlined_call_operand.vmem [shape: bf16[2,35,64], index: 1, kind: input, shape index: {}]
  %s2 = inlined_call_operand.vmem [shape: f32[2,3,128], index: 2, kind: output, shape index: {0}]
  %s3 = inlined_call_operand.hbm [shape: f32[2,32,128], index: 3, kind: output, shape index: {1}]
  %4 = xla_tuple %s2, %s3
  %s5 = sld [smem:[#allocation0]]
  $region49: #{tpu_custom_call.1} parent=0
    _
  %s7 = ssub.s32 1, %s5
  %s8 = scalar_select 0, %s7, %s5
  $region1: #{tpu_custom_call.1} parent=0
    #allocation2 [shape = 'u8[32768]{0}', space=vmem, size = 0x8000, scoped, tag = 'output window, operand 1']
    #allocation3 [shape = 's32[2]{0}', space=sflag, size = 0x8, scoped, tag = 'scoped memory for tpu_custom_call.1']
    %9 = vsyncpa [#allocation3], 0
    %s10 = scalar_lea.sflag [#allocation3], 1
    %11 = vsyncpa %s10, 0
    loop: start=0, step=1, limit=4
    $region2: #{tpu_custom_call.1} parent=1 // loop_pre_header
      _
    $region3: #{tpu_custom_call.1} parent=1 // loop_header
      %s13 = sphi 0, %s17
      %p14 = scmp.ge.s32.totalorder %s13, 4
      %s20 = sphi 0, %s32
      %s21 = sphi 0, %s28
      %s22 = sphi 0, %s20
      %s23 = sphi 0, %s21
      %s24 = sphi 0, %s22
      %s25 = sphi 0, %s23
      %s37 = sphi 0, %s39
      %s40 = sphi 0, %s37
      %s41 = sphi 0, %s40
      %s57 = sphi 0, %s41
      %s63 = sphi 0, %s65
      %s66 = sphi 0, %s63
      %s67 = sphi 0, %s66
      %s83 = sphi 0, %s67
      %s91 = sphi 0, %s93
      %s94 = sphi 0, %s91
      %s95 = sphi 0, %s94
      %s111 = sphi 0, %s95
      %s119 = sphi 0, %s121
      %s122 = sphi 0, %s119
      %s123 = sphi 0, %s122
      %s139 = sphi 0, %s123
    $region4: #{tpu_custom_call.1} parent=1 // loop_header_branch
      %16 = sbr.rel (%p14) target = $region8
    $region5: #{tpu_custom_call.1} parent=1 // loop_body
      %s18 = ssub.s32 %s13, 1
      %s19 = ssub.s32 %s13, 2
      %s26 = sadd.s32 1, %s21
      %p27 = scmp.ge.s32.totalorder %s26, 1
      %s28 = scalar_select %p27, 0, %s26
      %s29 = sadd.s32 1, %s20
      %s30 = scalar_select %p27, %s29, %s20
      %p31 = scmp.ge.s32.totalorder %s30, 2
      %s32 = scalar_select %p31, 0, %s30
      %s33 = sadd.s32 %s20, %s21
      %s34 = sadd.s32 %s32, %s28
      %s35 = ssub.s32 %s33, %s34
      %p36 = scmp.eq.s32.totalorder %s35, 0
      %s38 = sadd.s32 %s37, 1
      %s39 = scalar_select %p36, %s37, %s38
      %p42 = pneg %p36
      %p43 = scmp.eq.s32.totalorder %s13, 1
      %p44 = por %p42, %p43
      %p45 = scmp.ne.s32.totalorder %s37, %s40
      %p46 = scmp.eq.s32.totalorder %s13, 0
      %p47 = por %p45, %p46
      %p48 = scmp.ne.s32.totalorder %s37, %s40
      %p49 = scmp.eq.s32.totalorder %s18, 1
      %p50 = por %p48, %p49
      %p51 = scmp.ne.s32.totalorder %s40, %s41
      %p52 = scmp.eq.s32.totalorder %s18, 0
      %p53 = por %p51, %p52
      %p54 = scmp.ne.s32.totalorder %s40, %s41
      %p55 = scmp.eq.s32.totalorder %s19, 1
      %p56 = por %p54, %p55
      %p58 = scmp.ne.s32.totalorder %s41, %s57
      %p59 = scmp.eq.s32.totalorder %s19, 0
      %p60 = por %p58, %p59
      %s61 = ssub.s32 %s20, %s32
      %p62 = scmp.eq.s32.totalorder %s61, 0
      %s64 = sadd.s32 %s63, 1
      %s65 = scalar_select %p62, %s63, %s64
      %p68 = pneg %p62
      %p69 = scmp.eq.s32.totalorder %s13, 1
      %p70 = por %p68, %p69
      %p71 = scmp.ne.s32.totalorder %s63, %s66
      %p72 = scmp.eq.s32.totalorder %s13, 0
      %p73 = por %p71, %p72
      %p74 = scmp.ne.s32.totalorder %s63, %s66
      %p75 = scmp.eq.s32.totalorder %s18, 1
      %p76 = por %p74, %p75
      %p77 = scmp.ne.s32.totalorder %s66, %s67
      %p78 = scmp.eq.s32.totalorder %s18, 0
      %p79 = por %p77, %p78
      %p80 = scmp.ne.s32.totalorder %s66, %s67
      %p81 = scmp.eq.s32.totalorder %s19, 1
      %p82 = por %p80, %p81
      %p84 = scmp.ne.s32.totalorder %s67, %s83
      %p85 = scmp.eq.s32.totalorder %s19, 0
      %p86 = por %p84, %p85
      %s87 = ssub.s32 %s20, %s32
      %s88 = ssub.s32 %s21, %s28
      %s89 = sor.u32 %s87, %s88
      %p90 = scmp.eq.s32.totalorder %s89, 0
      %s92 = sadd.s32 %s91, 1
      %s93 = scalar_select %p90, %s91, %s92
      %p96 = pneg %p90
      %p97 = scmp.eq.s32.totalorder %s13, 1
      %p98 = por %p96, %p97
      %p99 = scmp.ne.s32.totalorder %s91, %s94
      %p100 = scmp.eq.s32.totalorder %s13, 0
      %p101 = por %p99, %p100
      %p102 = scmp.ne.s32.totalorder %s91, %s94
      %p103 = scmp.eq.s32.totalorder %s18, 1
      %p104 = por %p102, %p103
      %p105 = scmp.ne.s32.totalorder %s94, %s95
      %p106 = scmp.eq.s32.totalorder %s18, 0
      %p107 = por %p105, %p106
      %p108 = scmp.ne.s32.totalorder %s94, %s95
      %p109 = scmp.eq.s32.totalorder %s19, 1
      %p110 = por %p108, %p109
      %p112 = scmp.ne.s32.totalorder %s95, %s111
      %p113 = scmp.eq.s32.totalorder %s19, 0
      %p114 = por %p112, %p113
      %s115 = ssub.s32 %s20, %s32
      %s116 = ssub.s32 %s21, %s28
      %s117 = sor.u32 %s115, %s116
      %p118 = scmp.eq.s32.totalorder %s117, 0
      %s120 = sadd.s32 %s119, 1
      %s121 = scalar_select %p118, %s119, %s120
      %p124 = pneg %p118
      %p125 = scmp.eq.s32.totalorder %s13, 1
      %p126 = por %p124, %p125
      %p127 = scmp.ne.s32.totalorder %s119, %s122
      %p128 = scmp.eq.s32.totalorder %s13, 0
      %p129 = por %p127, %p128
      %p130 = scmp.ne.s32.totalorder %s119, %s122
      %p131 = scmp.eq.s32.totalorder %s18, 1
      %p132 = por %p130, %p131
      %p133 = scmp.ne.s32.totalorder %s122, %s123
      %p134 = scmp.eq.s32.totalorder %s18, 0
      %p135 = por %p133, %p134
      %p136 = scmp.ne.s32.totalorder %s122, %s123
      %p137 = scmp.eq.s32.totalorder %s19, 1
      %p138 = por %p136, %p137
      %p140 = scmp.ne.s32.totalorder %s123, %s139
      %p141 = scmp.eq.s32.totalorder %s19, 0
      %p142 = por %p140, %p141
      %p143 = scmp.le.s32.totalorder 1, %s13
      %p144 = scmp.lt.s32.totalorder %s13, 3
      %p145 = pnand %p143, %p144
      %p146 = pneg %p145
      // Predicated region
      $region9: #{tpu_custom_call.1} parent=5 // pred_check
        _
      $region10: #{tpu_custom_call.1} parent=5 // pred_check_branch
        %148 = sbr.rel (%p145) target = $region12
      $region11: #{tpu_custom_call.1} parent=5 // pred_region
        %s149 = ssub.s32 %s13, 1
      $region12: #{tpu_custom_call.1} parent=5 // pred_fallthru
        _
      %p150 = scmp.lt.s32.totalorder %s13, 2
      // Predicated region
      $region13: #{tpu_custom_call.1} parent=5 // pred_check
        %p151 = pneg %p150
      $region14: #{tpu_custom_call.1} parent=5 // pred_check_branch
        %153 = sbr.rel (%p151) target = $region16
      $region15: #{tpu_custom_call.1} parent=5 // pred_region
        // Predicated region
        $region17: #{tpu_custom_call.1} parent=15 // pred_check
          %p154 = pneg %p47
        $region18: #{tpu_custom_call.1} parent=15 // pred_check_branch
          %156 = sbr.rel (%p154) target = $region20
        $region19: #{tpu_custom_call.1} parent=15 // pred_region
          %s157 = sadd.s32 %s20, %s21
          %p158 = scmp.lt.s32.totalorder %s157, 1
          %s159 = scalar_select %p158, %s157, 1
          %s160 = smul.addr %s159, 2
          %s161 = smul.addr %s160, 4
          %s162 = scalar_lea.vmem %s0, %s161
          %s163 = sadd.s32 %s20, %s21
        $region20: #{tpu_custom_call.1} parent=15 // pred_fallthru
          _
        // Predicated region
        $region21: #{tpu_custom_call.1} parent=15 // pred_check
          %p164 = pneg %p73
        $region22: #{tpu_custom_call.1} parent=15 // pred_check_branch
          %166 = sbr.rel (%p164) target = $region24
        $region23: #{tpu_custom_call.1} parent=15 // pred_region
          %p167 = scmp.lt.s32.totalorder %s20, 1
          %s168 = scalar_select %p167, %s20, 1
          %s169 = smul.addr %s168, 5
          %s170 = smul.addr %s169, 4
          %s171 = scalar_lea.vmem %s1, %s170
        $region24: #{tpu_custom_call.1} parent=15 // pred_fallthru
          _
      $region16: #{tpu_custom_call.1} parent=5 // pred_fallthru
        _
      %p172 = scmp.le.s32.totalorder 1, %s13
      %p173 = scmp.lt.s32.totalorder %s13, 3
      %p174 = pnand %p172, %p173
      %p175 = pneg %p174
      // Predicated region
      $region25: #{tpu_custom_call.1} parent=5 // pred_check
        _
      $region26: #{tpu_custom_call.1} parent=5 // pred_check_branch
        %177 = sbr.rel (%p174) target = $region28
      $region27: #{tpu_custom_call.1} parent=5 // pred_region
        %s178 = ssub.s32 %s13, 1
        %s179 = sadd.s32 %s22, %s23
        %p180 = scmp.lt.s32.totalorder %s179, 1
        %s181 = scalar_select %p180, %s179, 1
        %s182 = smul.addr %s181, 2
        %s183 = smul.addr %s182, 4
        %s184 = scalar_lea.vmem %s0, %s183
        %p185 = pneg %p53
        %p186 = pneg %p50
        %p187 = scmp.lt.s32.totalorder %s22, 1
        %s188 = scalar_select %p187, %s22, 1
        %s189 = smul.addr %s188, 5
        %s190 = smul.addr %s189, 4
        %s191 = scalar_lea.vmem %s1, %s190
        %p192 = pneg %p79
        %p193 = pneg %p76
        %p194 = pneg %p107
        %p195 = pneg %p104
        %p196 = scmp.lt.s32.totalorder %s22, 1
        %s197 = scalar_select %p196, %s22, 1
        %p198 = scmp.lt.s32.totalorder %s23, 0
        %s199 = scalar_select %p198, %s23, 0
        %s200 = sadd.s32 %s199, %s197
        %s201 = smul.addr %s200, 4
        %s202 = scalar_lea.vmem %s2, %s201
        %p203 = pneg %p135
        %p204 = pneg %p132
        %s205 = sand.u32 %s122, 1
        %s206 = scalar_lea.sflag [#allocation3], %s205
        %s207 = sand.u32 %s122, 1
        %s208 = smul.addr %s207, 32
        %s209 = scalar_lea.vmem [#allocation2], %s208
        %s210 = sadd.s32 %s22, %s23
        %p211 = scmp.lt.s32.totalorder %s210, 1
        %s212 = scalar_select %p211, %s210, 1
        %s213 = smul.addr %s212, 2
        %s214 = smul.addr %s213, 4
        %s215 = scalar_lea.vmem %s0, %s214
        %s216 = sadd.s32 %s22, %s23
        %p217 = scmp.lt.s32.totalorder %s22, 1
        %s218 = scalar_select %p217, %s22, 1
        %s219 = smul.addr %s218, 5
        %s220 = smul.addr %s219, 4
        %s221 = scalar_lea.vmem %s1, %s220
        %p222 = scmp.lt.s32.totalorder %s22, 1
        %s223 = scalar_select %p222, %s22, 1
        %p224 = scmp.lt.s32.totalorder %s23, 0
        %s225 = scalar_select %p224, %s23, 0
        %s226 = sadd.s32 %s225, %s223
        %s227 = smul.addr %s226, 4
        %s228 = scalar_lea.vmem %s2, %s227
        %v230 = vlaneseq
        %v231 = vshrl.u32 %v230, 7
        %v232 = vadd.s32 %v231, 8
        %v233 = vadd.s32 %v231, 16
        %v234 = vadd.s32 %v231, 24
        %v235 = vadd.s32 %v231, 32
        %v236 = vadd.s32 %v231, 40
        %v237 = vadd.s32 %v231, 48
        %v238 = vadd.s32 %v231, 56
        %v239 = vld [vmem:[%s221] sm:$0xf]
        %v240 = vld [vmem:[%s221 + $0x4] sm:$0xf]
        %v241 = vld [vmem:[%s221 + $0x8] sm:$0xf]
        %v242 = vld [vmem:[%s221 + $0xc] sm:$0xf]
        %v243 = vld [vmem:[%s221 + $0x10] sm:$0x3]
        %v244 = vld [vmem:[%s215] ss:$4 sm:$0x3]
        %v245 = vlaneseq
        %v246 = vshrl.u32 %v245, 7
        %v247 = vsub.s32 0, %v246
        %v248 = vrot.slane %v244, %v247
        %v249 = vlaneseq
        %v250 = vshrl.u32 %v249, 7
        %v251 = vsub.s32 1, %v250
        %v252 = vrot.slane %v244, %v251
        %vm253 = vcmp.eq.s32.totalorder %v231, %v248
        %vm254 = vcmp.eq.s32.totalorder %v231, %v252
        %vm255 = vcmp.eq.s32.totalorder %v232, %v248
        %vm256 = vcmp.eq.s32.totalorder %v232, %v252
        %vm257 = vcmp.eq.s32.totalorder %v233, %v248
        %vm258 = vcmp.eq.s32.totalorder %v233, %v252
        %vm259 = vcmp.eq.s32.totalorder %v234, %v248
        %vm260 = vcmp.eq.s32.totalorder %v234, %v252
        %vm261 = vcmp.eq.s32.totalorder %v235, %v248
        %vm262 = vcmp.eq.s32.totalorder %v235, %v252
        %vm263 = vcmp.eq.s32.totalorder %v236, %v248
        %vm264 = vcmp.eq.s32.totalorder %v236, %v252
        %vm265 = vcmp.eq.s32.totalorder %v237, %v248
        %vm266 = vcmp.eq.s32.totalorder %v237, %v252
        %vm267 = vcmp.eq.s32.totalorder %v238, %v248
        %vm268 = vcmp.eq.s32.totalorder %v238, %v252
        %v269 = vsel %vm253, 1, 0
        %v270 = vsel %vm254, 1, 0
        %v271 = vsel %vm255, 1, 0
        %v272 = vsel %vm256, 1, 0
        %v273 = vsel %vm257, 1, 0
        %v274 = vsel %vm258, 1, 0
        %v275 = vsel %vm259, 1, 0
        %v276 = vsel %vm260, 1, 0
        %v277 = vsel %vm261, 1, 0
        %v278 = vsel %vm262, 1, 0
        %v279 = vsel %vm263, 1, 0
        %v280 = vsel %vm264, 1, 0
        %v281 = vsel %vm265, 1, 0
        %v282 = vsel %vm266, 1, 0
        %v283 = vsel %vm267, 1, 0
        %v284 = vsel %vm268, 1, 0
        %v285 = vcvt.s32.f32 %v269
        %v286 = vcvt.s32.f32 %v270
        %v287 = vcvt.s32.f32 %v271
        %v288 = vcvt.s32.f32 %v272
        %v289 = vcvt.s32.f32 %v273
        %v290 = vcvt.s32.f32 %v274
        %v291 = vcvt.s32.f32 %v275
        %v292 = vcvt.s32.f32 %v276
        %v293 = vcvt.s32.f32 %v277
        %v294 = vcvt.s32.f32 %v278
        %v295 = vcvt.s32.f32 %v279
        %v296 = vcvt.s32.f32 %v280
        %v297 = vcvt.s32.f32 %v281
        %v298 = vcvt.s32.f32 %v282
        %v299 = vcvt.s32.f32 %v283
        %v300 = vcvt.s32.f32 %v284
        %v301 = vpack.c.bf16 %v287, %v285
        %v302 = vpack.c.bf16 %v288, %v286
        %v303 = vpack.c.bf16 %v291, %v289
        %v304 = vpack.c.bf16 %v292, %v290
        %v305 = vpack.c.bf16 %v295, %v293
        %v306 = vpack.c.bf16 %v296, %v294
        %v307 = vpack.c.bf16 %v299, %v297
        %v308 = vpack.c.bf16 %v300, %v298
        %v314 = vunpack.c.l.b16 %v239
        %v315 = vunpack.c.l.b16 %v240
        %v316 = vunpack.c.l.b16 %v241
        %v317 = vunpack.c.l.b16 %v242
        %v318 = vunpack.c.l.b16 %v243
        %v319 = vpack.c.b16 %v315, %v314
        %v320 = vpack.c.b16 %v317, %v316
        %v321 = vpack.c.b16 %v318, %v318
        %vm322 = vcmask 523264
        %v324 = vsel %vm322, %v319, 0
        %v327 = vsel %vm322, %v320, 0
        %v330 = vsel %vm322, %v321, 0
        %332 = vmatprep.subr.bf16.mxu0 %v302
        %333 = vmatpush1.bf16.msra.mxu0 %v301
        %334 = vmatprep.subr.bf16.mxu0 %v304
        %335 = vmatpush1.bf16.msra.mxu0 %v303
        %336 = vmatprep.subr.bf16.mxu0 %v306
        %337 = vmatpush1.bf16.msra.mxu0 %v305
        %338 = vmatprep.subr.bf16.mxu0 %v308
        %339 = vmatpush1.bf16.msra.mxu0 %v307
        %340 = vmatprep.subr.bf16.mxu0 0
        %341 = vmatpush1.bf16.msra.mxu0 0
        %342 = vmatprep.subr.bf16.mxu0 0
        %343 = vmatpush1.bf16.msra.mxu0 0
        %344 = vmatprep.subr.bf16.mxu0 0
        %345 = vmatpush1.bf16.msra.mxu0 0
        %346 = vmatprep.subr.bf16.mxu0 0
        %347 = vmatpush1.bf16.msra.mxu0 0
        %348 = vmatprep.subr.bf16.mxu0 0
        %349 = vmatpush1.bf16.msra.mxu0 0
        %350 = vmatprep.subr.bf16.mxu0 0
        %351 = vmatpush1.bf16.msra.mxu0 0
        %352 = vmatprep.subr.bf16.mxu0 0
        %353 = vmatpush1.bf16.msra.mxu0 0
        %354 = vmatprep.subr.bf16.mxu0 0
        %355 = vmatpush1.bf16.msra.mxu0 0
        %356 = vmatprep.subr.bf16.mxu0 0
        %357 = vmatpush1.bf16.msra.mxu0 0
        %358 = vmatprep.subr.bf16.mxu0 0
        %359 = vmatpush1.bf16.msra.mxu0 0
        %360 = vmatprep.subr.bf16.mxu0 0
        %361 = vmatpush1.bf16.msra.mxu0 0
        %362 = vmatprep.subr.bf16.mxu0 0
        %363 = vmatpush1.bf16.msra.mxu0 0
        %364 = vmatprep.mubr.bf16.mxu0 0
        %365 = vmatmul.mubr.bf16.gmra.mrb[0].mxu0 %v324
        %v366 = vpop.f32.mrb[0].mxu0
        %v367 = vadd.f32 0.0, %v366
        %v368 = vpop.f32.mrb[0].mxu0
        %v369 = vadd.f32 0.0, %v368
        %v370 = vpop.f32.mrb[0].mxu0
        %v371 = vadd.f32 0.0, %v370
        %v372 = vpop.f32.mrb[0].mxu0
        %v373 = vadd.f32 0.0, %v372
        %374 = vmatprep.mubr.bf16.mxu0 0
        %375 = vmatmul.mubr.bf16.gmra.mrb[0].mxu0 %v327
        %v376 = vpop.f32.mrb[0].mxu0
        %v377 = vadd.f32 0.0, %v376
        %v378 = vpop.f32.mrb[0].mxu0
        %v379 = vadd.f32 0.0, %v378
        %v380 = vpop.f32.mrb[0].mxu0
        %v381 = vadd.f32 0.0, %v380
        %v382 = vpop.f32.mrb[0].mxu0
        %v383 = vadd.f32 0.0, %v382
        %384 = vmatprep.mubr.bf16.mxu0 0
        %385 = vmatmul.mubr.bf16.gmra.mrb[0].mxu0 %v330
        %v386 = vpop.f32.mrb[0].mxu0
        %v387 = vadd.f32 0.0, %v386
        %v388 = vpop.f32.mrb[0].mxu0
        %v389 = vadd.f32 0.0, %v388
        %v390 = vpop.f32.mrb[0].mxu0
        %v391 = vpop.f32.mrb[0].mxu0
        %392 = vdwg.mxu0
        %v393 = vmax.f32 %v367, %v369
        %v394 = vmax.f32 %v371, %v373
        %v395 = vmax.f32 %v377, %v379
        %v396 = vmax.f32 %v381, %v383
        %v397 = vmax.f32 %v387, %v389
        %s398 = scalar_lea.vmem %s215, 1
        %v399 = vld [vmem:[%s398] ss:$4 sm:$0x3]
        %v400 = vlaneseq
        %v401 = vshrl.u32 %v400, 7
        %v402 = vsub.s32 0, %v401
        %v403 = vrot.slane %v399, %v402
        %v404 = vlaneseq
        %v405 = vshrl.u32 %v404, 7
        %v406 = vsub.s32 1, %v405
        %v407 = vrot.slane %v399, %v406
        %vm408 = vcmp.eq.s32.totalorder %v231, %v403
        %vm409 = vcmp.eq.s32.totalorder %v231, %v407
        %vm410 = vcmp.eq.s32.totalorder %v232, %v403
        %vm411 = vcmp.eq.s32.totalorder %v232, %v407
        %vm412 = vcmp.eq.s32.totalorder %v233, %v403
        %vm413 = vcmp.eq.s32.totalorder %v233, %v407
        %vm414 = vcmp.eq.s32.totalorder %v234, %v403
        %vm415 = vcmp.eq.s32.totalorder %v234, %v407
        %vm416 = vcmp.eq.s32.totalorder %v235, %v403
        %vm417 = vcmp.eq.s32.totalorder %v235, %v407
        %vm418 = vcmp.eq.s32.totalorder %v236, %v403
        %vm419 = vcmp.eq.s32.totalorder %v236, %v407
        %vm420 = vcmp.eq.s32.totalorder %v237, %v403
        %vm421 = vcmp.eq.s32.totalorder %v237, %v407
        %vm422 = vcmp.eq.s32.totalorder %v238, %v403
        %vm423 = vcmp.eq.s32.totalorder %v238, %v407
        %v424 = vsel %vm408, 1, 0
        %v425 = vsel %vm409, 1, 0
        %v426 = vsel %vm410, 1, 0
        %v427 = vsel %vm411, 1, 0
        %v428 = vsel %vm412, 1, 0
        %v429 = vsel %vm413, 1, 0
        %v430 = vsel %vm414, 1, 0
        %v431 = vsel %vm415, 1, 0
        %v432 = vsel %vm416, 1, 0
        %v433 = vsel %vm417, 1, 0
        %v434 = vsel %vm418, 1, 0
        %v435 = vsel %vm419, 1, 0
        %v436 = vsel %vm420, 1, 0
        %v437 = vsel %vm421, 1, 0
        %v438 = vsel %vm422, 1, 0
        %v439 = vsel %vm423, 1, 0
        %v440 = vcvt.s32.f32 %v424
        %v441 = vcvt.s32.f32 %v425
        %v442 = vcvt.s32.f32 %v426
        %v443 = vcvt.s32.f32 %v427
        %v444 = vcvt.s32.f32 %v428
        %v445 = vcvt.s32.f32 %v429
        %v446 = vcvt.s32.f32 %v430
        %v447 = vcvt.s32.f32 %v431
        %v448 = vcvt.s32.f32 %v432
        %v449 = vcvt.s32.f32 %v433
        %v450 = vcvt.s32.f32 %v434
        %v451 = vcvt.s32.f32 %v435
        %v452 = vcvt.s32.f32 %v436
        %v453 = vcvt.s32.f32 %v437
        %v454 = vcvt.s32.f32 %v438
        %v455 = vcvt.s32.f32 %v439
        %v456 = vpack.c.bf16 %v442, %v440
        %v457 = vpack.c.bf16 %v443, %v441
        %v458 = vpack.c.bf16 %v446, %v444
        %v459 = vpack.c.bf16 %v447, %v445
        %v460 = vpack.c.bf16 %v450, %v448
        %v461 = vpack.c.bf16 %v451, %v449
        %v462 = vpack.c.bf16 %v454, %v452
        %v463 = vpack.c.bf16 %v455, %v453
        %464 = vmatprep.subr.bf16.mxu0 %v457
        %465 = vmatpush1.bf16.msra.mxu0 %v456
        %466 = vmatprep.subr.bf16.mxu0 %v459
        %467 = vmatpush1.bf16.msra.mxu0 %v458
        %468 = vmatprep.subr.bf16.mxu0 %v461
        %469 = vmatpush1.bf16.msra.mxu0 %v460
        %470 = vmatprep.subr.bf16.mxu0 %v463
        %471 = vmatpush1.bf16.msra.mxu0 %v462
        %472 = vmatprep.subr.bf16.mxu0 0
        %473 = vmatpush1.bf16.msra.mxu0 0
        %474 = vmatprep.subr.bf16.mxu0 0
        %475 = vmatpush1.bf16.msra.mxu0 0
        %476 = vmatprep.subr.bf16.mxu0 0
        %477 = vmatpush1.bf16.msra.mxu0 0
        %478 = vmatprep.subr.bf16.mxu0 0
        %479 = vmatpush1.bf16.msra.mxu0 0
        %480 = vmatprep.subr.bf16.mxu0 0
        %481 = vmatpush1.bf16.msra.mxu0 0
        %482 = vmatprep.subr.bf16.mxu0 0
        %483 = vmatpush1.bf16.msra.mxu0 0
        %484 = vmatprep.subr.bf16.mxu0 0
        %485 = vmatpush1.bf16.msra.mxu0 0
        %486 = vmatprep.subr.bf16.mxu0 0
        %487 = vmatpush1.bf16.msra.mxu0 0
        %488 = vmatprep.subr.bf16.mxu0 0
        %489 = vmatpush1.bf16.msra.mxu0 0
        %490 = vmatprep.subr.bf16.mxu0 0
        %491 = vmatpush1.bf16.msra.mxu0 0
        %492 = vmatprep.subr.bf16.mxu0 0
        %493 = vmatpush1.bf16.msra.mxu0 0
        %494 = vmatprep.subr.bf16.mxu0 0
        %495 = vmatpush1.bf16.msra.mxu0 0
        %496 = vmatprep.mubr.bf16.mxu0 0
        %497 = vmatmul.mubr.bf16.gmra.mrb[0].mxu0 %v324
        %v498 = vpop.f32.mrb[0].mxu0
        %v499 = vadd.f32 0.0, %v498
        %v500 = vpop.f32.mrb[0].mxu0
        %v501 = vadd.f32 0.0, %v500
        %v502 = vpop.f32.mrb[0].mxu0
        %v503 = vadd.f32 0.0, %v502
        %v504 = vpop.f32.mrb[0].mxu0
        %v505 = vadd.f32 0.0, %v504
        %506 = vmatprep.mubr.bf16.mxu0 0
        %507 = vmatmul.mubr.bf16.gmra.mrb[0].mxu0 %v327
        %v508 = vpop.f32.mrb[0].mxu0
        %v509 = vadd.f32 0.0, %v508
        %v510 = vpop.f32.mrb[0].mxu0
        %v511 = vadd.f32 0.0, %v510
        %v512 = vpop.f32.mrb[0].mxu0
        %v513 = vadd.f32 0.0, %v512
        %v514 = vpop.f32.mrb[0].mxu0
        %v515 = vadd.f32 0.0, %v514
        %516 = vmatprep.mubr.bf16.mxu0 0
        %517 = vmatmul.mubr.bf16.gmra.mrb[0].mxu0 %v330
        %v518 = vpop.f32.mrb[0].mxu0
        %v519 = vadd.f32 0.0, %v518
        %v520 = vpop.f32.mrb[0].mxu0
        %v521 = vadd.f32 0.0, %v520
        %v522 = vpop.f32.mrb[0].mxu0
        %v523 = vpop.f32.mrb[0].mxu0
        %524 = vdwg.mxu0
        %v525 = vmax.f32 %v393, %v499
        %v526 = vmax.f32 %v394, %v503
        %v527 = vmax.f32 %v395, %v509
        %v528 = vmax.f32 %v396, %v513
        %v529 = vmax.f32 %v397, %v519
        %v530 = vmax.f32 %v525, %v501
        %v531 = vmax.f32 %v526, %v505
        %v532 = vmax.f32 %v527, %v511
        %v533 = vmax.f32 %v528, %v515
        %v534 = vmax.f32 %v529, %v521
        %s535 = scalar_lea.vmem %s215, 2
        %v536 = vld [vmem:[%s535] ss:$4 sm:$0x3]
        %v537 = vlaneseq
        %v538 = vshrl.u32 %v537, 7
        %v539 = vsub.s32 0, %v538
        %v540 = vrot.slane %v536, %v539
        %v541 = vlaneseq
        %v542 = vshrl.u32 %v541, 7
        %v543 = vsub.s32 1, %v542
        %v544 = vrot.slane %v536, %v543
        %vm545 = vcmp.eq.s32.totalorder %v231, %v540
        %vm546 = vcmp.eq.s32.totalorder %v231, %v544
        %vm547 = vcmp.eq.s32.totalorder %v232, %v540
        %vm548 = vcmp.eq.s32.totalorder %v232, %v544
        %vm549 = vcmp.eq.s32.totalorder %v233, %v540
        %vm550 = vcmp.eq.s32.totalorder %v233, %v544
        %vm551 = vcmp.eq.s32.totalorder %v234, %v540
        %vm552 = vcmp.eq.s32.totalorder %v234, %v544
        %vm553 = vcmp.eq.s32.totalorder %v235, %v540
        %vm554 = vcmp.eq.s32.totalorder %v235, %v544
        %vm555 = vcmp.eq.s32.totalorder %v236, %v540
        %vm556 = vcmp.eq.s32.totalorder %v236, %v544
        %vm557 = vcmp.eq.s32.totalorder %v237, %v540
        %vm558 = vcmp.eq.s32.totalorder %v237, %v544
        %vm559 = vcmp.eq.s32.totalorder %v238, %v540
        %vm560 = vcmp.eq.s32.totalorder %v238, %v544
        %v561 = vsel %vm545, 1, 0
        %v562 = vsel %vm546, 1, 0
        %v563 = vsel %vm547, 1, 0
        %v564 = vsel %vm548, 1, 0
        %v565 = vsel %vm549, 1, 0
        %v566 = vsel %vm550, 1, 0
        %v567 = vsel %vm551, 1, 0
        %v568 = vsel %vm552, 1, 0
        %v569 = vsel %vm553, 1, 0
        %v570 = vsel %vm554, 1, 0
        %v571 = vsel %vm555, 1, 0
        %v572 = vsel %vm556, 1, 0
        %v573 = vsel %vm557, 1, 0
        %v574 = vsel %vm558, 1, 0
        %v575 = vsel %vm559, 1, 0
        %v576 = vsel %vm560, 1, 0
        %v577 = vcvt.s32.f32 %v561
        %v578 = vcvt.s32.f32 %v562
        %v579 = vcvt.s32.f32 %v563
        %v580 = vcvt.s32.f32 %v564
        %v581 = vcvt.s32.f32 %v565
        %v582 = vcvt.s32.f32 %v566
        %v583 = vcvt.s32.f32 %v567
        %v584 = vcvt.s32.f32 %v568
        %v585 = vcvt.s32.f32 %v569
        %v586 = vcvt.s32.f32 %v570
        %v587 = vcvt.s32.f32 %v571
        %v588 = vcvt.s32.f32 %v572
        %v589 = vcvt.s32.f32 %v573
        %v590 = vcvt.s32.f32 %v574
        %v591 = vcvt.s32.f32 %v575
        %v592 = vcvt.s32.f32 %v576
        %v593 = vpack.c.bf16 %v579, %v577
        %v594 = vpack.c.bf16 %v580, %v578
        %v595 = vpack.c.bf16 %v583, %v581
        %v596 = vpack.c.bf16 %v584, %v582
        %v597 = vpack.c.bf16 %v587, %v585
        %v598 = vpack.c.bf16 %v588, %v586
        %v599 = vpack.c.bf16 %v591, %v589
        %v600 = vpack.c.bf16 %v592, %v590
        %601 = vmatprep.subr.bf16.mxu0 %v594
        %602 = vmatpush1.bf16.msra.mxu0 %v593
        %603 = vmatprep.subr.bf16.mxu0 %v596
        %604 = vmatpush1.bf16.msra.mxu0 %v595
        %605 = vmatprep.subr.bf16.mxu0 %v598
        %606 = vmatpush1.bf16.msra.mxu0 %v597
        %607 = vmatprep.subr.bf16.mxu0 %v600
        %608 = vmatpush1.bf16.msra.mxu0 %v599
        %609 = vmatprep.subr.bf16.mxu0 0
        %610 = vmatpush1.bf16.msra.mxu0 0
        %611 = vmatprep.subr.bf16.mxu0 0
        %612 = vmatpush1.bf16.msra.mxu0 0
        %613 = vmatprep.subr.bf16.mxu0 0
        %614 = vmatpush1.bf16.msra.mxu0 0
        %615 = vmatprep.subr.bf16.mxu0 0
        %616 = vmatpush1.bf16.msra.mxu0 0
        %617 = vmatprep.subr.bf16.mxu0 0
        %618 = vmatpush1.bf16.msra.mxu0 0
        %619 = vmatprep.subr.bf16.mxu0 0
        %620 = vmatpush1.bf16.msra.mxu0 0
        %621 = vmatprep.subr.bf16.mxu0 0
        %622 = vmatpush1.bf16.msra.mxu0 0
        %623 = vmatprep.subr.bf16.mxu0 0
        %624 = vmatpush1.bf16.msra.mxu0 0
        %625 = vmatprep.subr.bf16.mxu0 0
        %626 = vmatpush1.bf16.msra.mxu0 0
        %627 = vmatprep.subr.bf16.mxu0 0
        %628 = vmatpush1.bf16.msra.mxu0 0
        %629 = vmatprep.subr.bf16.mxu0 0
        %630 = vmatpush1.bf16.msra.mxu0 0
        %631 = vmatprep.subr.bf16.mxu0 0
        %632 = vmatpush1.bf16.msra.mxu0 0
        %633 = vmatprep.mubr.bf16.mxu0 0
        %634 = vmatmul.mubr.bf16.gmra.mrb[0].mxu0 %v324
        %v635 = vpop.f32.mrb[0].mxu0
        %v636 = vadd.f32 0.0, %v635
        %v637 = vpop.f32.mrb[0].mxu0
        %v638 = vadd.f32 0.0, %v637
        %v639 = vpop.f32.mrb[0].mxu0
        %v640 = vadd.f32 0.0, %v639
        %v641 = vpop.f32.mrb[0].mxu0
        %v642 = vadd.f32 0.0, %v641
        %643 = vmatprep.mubr.bf16.mxu0 0
        %644 = vmatmul.mubr.bf16.gmra.mrb[0].mxu0 %v327
        %v645 = vpop.f32.mrb[0].mxu0
        %v646 = vadd.f32 0.0, %v645
        %v647 = vpop.f32.mrb[0].mxu0
        %v648 = vadd.f32 0.0, %v647
        %v649 = vpop.f32.mrb[0].mxu0
        %v650 = vadd.f32 0.0, %v649
        %v651 = vpop.f32.mrb[0].mxu0
        %v652 = vadd.f32 0.0, %v651
        %653 = vmatprep.mubr.bf16.mxu0 0
        %654 = vmatmul.mubr.bf16.gmra.mrb[0].mxu0 %v330
        %v655 = vpop.f32.mrb[0].mxu0
        %v656 = vadd.f32 0.0, %v655
        %v657 = vpop.f32.mrb[0].mxu0
        %v658 = vadd.f32 0.0, %v657
        %v659 = vpop.f32.mrb[0].mxu0
        %v660 = vpop.f32.mrb[0].mxu0
        %661 = vdwg.mxu0
        %v662 = vmax.f32 %v530, %v636
        %v663 = vmax.f32 %v531, %v640
        %v664 = vmax.f32 %v532, %v646
        %v665 = vmax.f32 %v533, %v650
        %v666 = vmax.f32 %v534, %v656
        %v667 = vmax.f32 %v662, %v638
        %v668 = vmax.f32 %v663, %v642
        %v669 = vmax.f32 %v664, %v648
        %v670 = vmax.f32 %v665, %v652
        %v671 = vmax.f32 %v666, %v658
        %s672 = scalar_lea.vmem %s215, 3
        %v673 = vld [vmem:[%s672] ss:$4 sm:$0x3]
        %v674 = vlaneseq
        %v675 = vshrl.u32 %v674, 7
        %v676 = vsub.s32 0, %v675
        %v677 = vrot.slane %v673, %v676
        %v678 = vlaneseq
        %v679 = vshrl.u32 %v678, 7
        %v680 = vsub.s32 1, %v679
        %v681 = vrot.slane %v673, %v680
        %vm682 = vcmp.eq.s32.totalorder %v231, %v677
        %vm683 = vcmp.eq.s32.totalorder %v231, %v681
        %vm684 = vcmp.eq.s32.totalorder %v232, %v677
        %vm685 = vcmp.eq.s32.totalorder %v232, %v681
        %vm686 = vcmp.eq.s32.totalorder %v233, %v677
        %vm687 = vcmp.eq.s32.totalorder %v233, %v681
        %vm688 = vcmp.eq.s32.totalorder %v234, %v677
        %vm689 = vcmp.eq.s32.totalorder %v234, %v681
        %vm690 = vcmp.eq.s32.totalorder %v235, %v677
        %vm691 = vcmp.eq.s32.totalorder %v235, %v681
        %vm692 = vcmp.eq.s32.totalorder %v236, %v677
        %vm693 = vcmp.eq.s32.totalorder %v236, %v681
        %vm694 = vcmp.eq.s32.totalorder %v237, %v677
        %vm695 = vcmp.eq.s32.totalorder %v237, %v681
        %vm696 = vcmp.eq.s32.totalorder %v238, %v677
        %vm697 = vcmp.eq.s32.totalorder %v238, %v681
        %v698 = vsel %vm682, 1, 0
        %v699 = vsel %vm683, 1, 0
        %v700 = vsel %vm684, 1, 0
        %v701 = vsel %vm685, 1, 0
        %v702 = vsel %vm686, 1, 0
        %v703 = vsel %vm687, 1, 0
        %v704 = vsel %vm688, 1, 0
        %v705 = vsel %vm689, 1, 0
        %v706 = vsel %vm690, 1, 0
        %v707 = vsel %vm691, 1, 0
        %v708 = vsel %vm692, 1, 0
        %v709 = vsel %vm693, 1, 0
        %v710 = vsel %vm694, 1, 0
        %v711 = vsel %vm695, 1, 0
        %v712 = vsel %vm696, 1, 0
        %v713 = vsel %vm697, 1, 0
        %v714 = vcvt.s32.f32 %v698
        %v715 = vcvt.s32.f32 %v699
        %v716 = vcvt.s32.f32 %v700
        %v717 = vcvt.s32.f32 %v701
        %v718 = vcvt.s32.f32 %v702
        %v719 = vcvt.s32.f32 %v703
        %v720 = vcvt.s32.f32 %v704
        %v721 = vcvt.s32.f32 %v705
        %v722 = vcvt.s32.f32 %v706
        %v723 = vcvt.s32.f32 %v707
        %v724 = vcvt.s32.f32 %v708
        %v725 = vcvt.s32.f32 %v709
        %v726 = vcvt.s32.f32 %v710
        %v727 = vcvt.s32.f32 %v711
        %v728 = vcvt.s32.f32 %v712
        %v729 = vcvt.s32.f32 %v713
        %v730 = vpack.c.bf16 %v716, %v714
        %v731 = vpack.c.bf16 %v717, %v715
        %v732 = vpack.c.bf16 %v720, %v718
        %v733 = vpack.c.bf16 %v721, %v719
        %v734 = vpack.c.bf16 %v724, %v722
        %v735 = vpack.c.bf16 %v725, %v723
        %v736 = vpack.c.bf16 %v728, %v726
        %v737 = vpack.c.bf16 %v729, %v727
        %738 = vmatprep.subr.bf16.mxu0 %v731
        %739 = vmatpush1.bf16.msra.mxu0 %v730
        %740 = vmatprep.subr.bf16.mxu0 %v733
        %741 = vmatpush1.bf16.msra.mxu0 %v732
        %742 = vmatprep.subr.bf16.mxu0 %v735
        %743 = vmatpush1.bf16.msra.mxu0 %v734
        %744 = vmatprep.subr.bf16.mxu0 %v737
        %745 = vmatpush1.bf16.msra.mxu0 %v736
        %746 = vmatprep.subr.bf16.mxu0 0
        %747 = vmatpush1.bf16.msra.mxu0 0
        %748 = vmatprep.subr.bf16.mxu0 0
        %749 = vmatpush1.bf16.msra.mxu0 0
        %750 = vmatprep.subr.bf16.mxu0 0
        %751 = vmatpush1.bf16.msra.mxu0 0
        %752 = vmatprep.subr.bf16.mxu0 0
        %753 = vmatpush1.bf16.msra.mxu0 0
        %754 = vmatprep.subr.bf16.mxu0 0
        %755 = vmatpush1.bf16.msra.mxu0 0
        %756 = vmatprep.subr.bf16.mxu0 0
        %757 = vmatpush1.bf16.msra.mxu0 0
        %758 = vmatprep.subr.bf16.mxu0 0
        %759 = vmatpush1.bf16.msra.mxu0 0
        %760 = vmatprep.subr.bf16.mxu0 0
        %761 = vmatpush1.bf16.msra.mxu0 0
        %762 = vmatprep.subr.bf16.mxu0 0
        %763 = vmatpush1.bf16.msra.mxu0 0
        %764 = vmatprep.subr.bf16.mxu0 0
        %765 = vmatpush1.bf16.msra.mxu0 0
        %766 = vmatprep.subr.bf16.mxu0 0
        %767 = vmatpush1.bf16.msra.mxu0 0
        %768 = vmatprep.subr.bf16.mxu0 0
        %769 = vmatpush1.bf16.msra.mxu0 0
        %770 = vmatprep.mubr.bf16.mxu0 0
        %771 = vmatmul.mubr.bf16.gmra.mrb[0].mxu0 %v324
        %v772 = vpop.f32.mrb[0].mxu0
        %v773 = vadd.f32 0.0, %v772
        %v774 = vpop.f32.mrb[0].mxu0
        %v775 = vadd.f32 0.0, %v774
        %v776 = vpop.f32.mrb[0].mxu0
        %v777 = vadd.f32 0.0, %v776
        %v778 = vpop.f32.mrb[0].mxu0
        %v779 = vadd.f32 0.0, %v778
        %780 = vmatprep.mubr.bf16.mxu0 0
        %781 = vmatmul.mubr.bf16.gmra.mrb[0].mxu0 %v327
        %v782 = vpop.f32.mrb[0].mxu0
        %v783 = vadd.f32 0.0, %v782
        %v784 = vpop.f32.mrb[0].mxu0
        %v785 = vadd.f32 0.0, %v784
        %v786 = vpop.f32.mrb[0].mxu0
        %v787 = vadd.f32 0.0, %v786
        %v788 = vpop.f32.mrb[0].mxu0
        %v789 = vadd.f32 0.0, %v788
        %790 = vmatprep.mubr.bf16.mxu0 0
        %791 = vmatmul.mubr.bf16.gmra.mrb[0].mxu0 %v330
        %v792 = vpop.f32.mrb[0].mxu0
        %v793 = vadd.f32 0.0, %v792
        %v794 = vpop.f32.mrb[0].mxu0
        %v795 = vadd.f32 0.0, %v794
        %v796 = vpop.f32.mrb[0].mxu0
        %v797 = vpop.f32.mrb[0].mxu0
        %798 = vdwg.mxu0
        %v799 = vmax.f32 %v667, %v773
        %v800 = vmax.f32 %v668, %v777
        %v801 = vmax.f32 %v669, %v783
        %v802 = vmax.f32 %v670, %v787
        %v803 = vmax.f32 %v671, %v793
        %v804 = vmax.f32 %v799, %v775
        %v805 = vmax.f32 %v800, %v779
        %v806 = vmax.f32 %v801, %v785
        %v807 = vmax.f32 %v802, %v789
        %v808 = vmax.f32 %v803, %v795
        %809 = vst [vmem:[%s209] sm:$0xff] %v804
        %810 = vst [vmem:[%s209 + $0x8] sm:$0xff] %v805
        %811 = vst [vmem:[%s209 + $0x10] sm:$0xff] %v806
        %812 = vst [vmem:[%s209 + $0x18] sm:$0xff] %v807
        %813 = vst [vmem:[%s228] sm:$0x7] %v808
        %p814 = scmp.lt.s32.totalorder %s22, 1
        %s815 = scalar_select %p814, %s22, 1
        %p816 = scmp.lt.s32.totalorder %s23, 0
        %s817 = scalar_select %p816, %s23, 0
        %s818 = sadd.s32 %s817, %s815
        %s819 = smul.addr %s818, 4
        %s820 = scalar_lea.vmem %s2, %s819
        %s821 = sand.u32 %s122, 1
        %s822 = scalar_lea.sflag [#allocation3], %s821
        %s823 = sand.u32 %s122, 1
        %s824 = smul.addr %s823, 32
        %s825 = scalar_lea.vmem [#allocation2], %s824
        // Predicated region
        $region29: #{tpu_custom_call.1} parent=27 // pred_check
          %p826 = pneg %p104
        $region30: #{tpu_custom_call.1} parent=27 // pred_check_branch
          %828 = sbr.rel (%p826) target = $region32
        $region31: #{tpu_custom_call.1} parent=27 // pred_region
          _
        $region32: #{tpu_custom_call.1} parent=27 // pred_fallthru
          _
        // Predicated region
        $region33: #{tpu_custom_call.1} parent=27 // pred_check
          %p829 = pneg %p132
        $region34: #{tpu_custom_call.1} parent=27 // pred_check_branch
          %831 = sbr.rel (%p829) target = $region36
        $region35: #{tpu_custom_call.1} parent=27 // pred_region
          %s833 = ssub.s32 512, 512
          %834 = vsyncadd %s822, %s833
          %s835 = smul.addr %s22, 4
          %s836 = sadd.s32 %s23, %s835
          %s837 = smul.addr %s836, 128
          %s838 = scalar_lea.hbm %s3, %s837
          %s839 = sshll.u32 %s825, 4
          %s840 = int_to_ptr.vmem [resolvable:$true] %s839
          %845 = dma.vmem_to_hbm [thread:$0]  %s840, 512, %s838, %s822, 128, 128, 8
        $region36: #{tpu_custom_call.1} parent=27 // pred_fallthru
          _
      $region28: #{tpu_custom_call.1} parent=5 // pred_fallthru
        _
      %p846 = scmp.le.s32.totalorder 2, %s13
      // Predicated region
      $region37: #{tpu_custom_call.1} parent=5 // pred_check
        %p847 = pneg %p846
      $region38: #{tpu_custom_call.1} parent=5 // pred_check_branch
        %849 = sbr.rel (%p847) target = $region40
      $region39: #{tpu_custom_call.1} parent=5 // pred_region
        %s850 = ssub.s32 %s13, 2
        // Predicated region
        $region41: #{tpu_custom_call.1} parent=39 // pred_check
          %p851 = pneg %p110
        $region42: #{tpu_custom_call.1} parent=39 // pred_check_branch
          %853 = sbr.rel (%p851) target = $region44
        $region43: #{tpu_custom_call.1} parent=39 // pred_region
          %p854 = scmp.lt.s32.totalorder %s24, 1
          %s855 = scalar_select %p854, %s24, 1
          %p856 = scmp.lt.s32.totalorder %s25, 0
          %s857 = scalar_select %p856, %s25, 0
          %s858 = sadd.s32 %s857, %s855
          %s859 = smul.addr %s858, 4
          %s860 = scalar_lea.vmem %s2, %s859
        $region44: #{tpu_custom_call.1} parent=39 // pred_fallthru
          _
        // Predicated region
        $region45: #{tpu_custom_call.1} parent=39 // pred_check
          %p861 = pneg %p138
        $region46: #{tpu_custom_call.1} parent=39 // pred_check_branch
          %863 = sbr.rel (%p861) target = $region48
        $region47: #{tpu_custom_call.1} parent=39 // pred_region
          %s864 = sand.u32 %s123, 1
          %s865 = scalar_lea.sflag [#allocation3], %s864
          %s866 = sand.u32 %s123, 1
          %s867 = smul.addr %s866, 32
          %s868 = scalar_lea.vmem [#allocation2], %s867
          %869 = dma.done %s865, 512
        $region48: #{tpu_custom_call.1} parent=39 // pred_fallthru
          _
      $region40: #{tpu_custom_call.1} parent=5 // pred_fallthru
        _
    $region6: #{tpu_custom_call.1} parent=1 // loop_footer
      %s17 = sadd.s32 1, %s13
    $region7: #{tpu_custom_call.1} parent=1 // loop_footer_branch
      %12 = sbr.rel target = $region3
    $region8: #{tpu_custom_call.1} parent=1 // loop_exit
      _
    %870 = vsyncpa [#allocation3], 1
    %s871 = scalar_lea.sflag [#allocation3], 1
    %872 = vsyncpa %s871, 1

</llo_original>
